<compile_context>
chip_gen: v7x
topology: tpu7x:2x2x1
jax: 0.10.0
libtpu: 0.0.40
codegen_flags: <defaults>
</compile_context>

<pallas_src>
import math

import jax
import jax.numpy as jnp
from jax.experimental import pallas as pl
from jax.experimental.pallas import tpu as pltpu

_MASK_VALUE = -1e30               # finite "-inf": exp() underflows to 0, never produces NaN
_VMEM_LIMIT_BYTES = 48 * 1024 * 1024   # explicit scoped-VMEM cap (fits v5e/v6e/v7x)


def _layernorm(x, w2d, b2d, eps=1e-5):
    # x: (T, C) f32, w2d/b2d: (1, C); biased variance, matching F.layer_norm
    mu = jnp.mean(x, axis=-1, keepdims=True)
    xc = x - mu
    var = jnp.mean(xc * xc, axis=-1, keepdims=True)
    return xc * jax.lax.rsqrt(var + eps) * w2d + b2d


def _gelu_exact(x):
    # PyTorch nn.GELU() default (approximate='none'): 0.5*x*(1+erf(x/sqrt(2)))
    return 0.5 * x * (1.0 + jax.lax.erf(x * (1.0 / math.sqrt(2.0))))


# ---------------------------------------------------------------------------
# Stage 1: LN1 + fused QKV projection -> head-major bf16 q/k/v, q pre-scaled.
# ---------------------------------------------------------------------------
def qkv_kernel(x_ref, ln1w_ref, ln1b_ref, wqkv_ref, bqkv_ref,
               q_ref, k_ref, v_ref):
    n_head, _, hd = q_ref.shape
    C = n_head * hd
    sm_scale = 1.0 / math.sqrt(hd)

    x = x_ref[...].astype(jnp.float32)                                   # (bt, C)
    h = _layernorm(x, ln1w_ref[...], ln1b_ref[...]).astype(jnp.bfloat16)
    qkv = jnp.dot(h, wqkv_ref[...],
                  preferred_element_type=jnp.float32) + bqkv_ref[...]    # (bt, 3C) f32
    q2d = qkv[:, 0 * C:1 * C] * sm_scale      # fold 1/sqrt(hd) into q once
    k2d = qkv[:, 1 * C:2 * C]
    v2d = qkv[:, 2 * C:3 * C]
    # head split happens ONCE here (outside the attention inner loop)
    for hh in range(n_head):
        sl = slice(hh * hd, (hh + 1) * hd)
        q_ref[hh] = q2d[:, sl].astype(q_ref.dtype)
        k_ref[hh] = k2d[:, sl].astype(k_ref.dtype)
        v_ref[hh] = v2d[:, sl].astype(v_ref.dtype)


# ---------------------------------------------------------------------------
# Stage 2: flash-style causal attention + attn-proj + residual + LN2 + MLP + residual.
# Grid = (B, num_q_tiles, num_kv_tiles); kv is the (arbitrary) reduction axis.
# ---------------------------------------------------------------------------
def attn_mlp_kernel(x_ref, q_ref, k_ref, v_ref,
                    wap_ref, bap_ref, ln2w_ref, ln2b_ref,
                    wfc_ref, bfc_ref, wmp_ref, bmp_ref,
                    o_ref, m_ref, l_ref, acc_ref):
    n_head, bq, hd = q_ref.shape
    bkv = k_ref.shape[1]
    qi = pl.program_id(1)
    ki = pl.program_id(2)

    q_first = qi * bq
    q_last = q_first + (bq - 1)
    k_first = ki * bkv
    k_last = k_first + (bkv - 1)

    @pl.when(ki == 0)
    def _init():
        m_ref[...] = jnp.full(m_ref.shape, _MASK_VALUE, m_ref.dtype)
        l_ref[...] = jnp.zeros(l_ref.shape, l_ref.dtype)
        acc_ref[...] = jnp.zeros(acc_ref.shape, acc_ref.dtype)

    def _accumulate(apply_mask):
        q = q_ref[...]                      # (H, bq, hd)  bf16, already scaled
        k = k_ref[...]                      # (H, bkv, hd) bf16
        v = v_ref[...]                      # (H, bkv, hd) bf16
        # batched-head score matmul (single dot_general, f32 accumulation)
        s = jnp.einsum("hqd,hkd->hqk", q, k,
                       preferred_element_type=jnp.float32)   # (H, bq, bkv) f32
        if apply_mask:
            # per-tile causal mask from offset iota; only built on diagonal-crossing tiles
            q_pos = q_first + jax.lax.broadcasted_iota(jnp.int32, (1, bq, bkv), 1)
            k_pos = k_first + jax.lax.broadcasted_iota(jnp.int32, (1, bq, bkv), 2)
            s = jnp.where(q_pos >= k_pos, s, _MASK_VALUE)

        m_prev = m_ref[...]
        m_new = jnp.maximum(m_prev, jnp.max(s, axis=-1, keepdims=True))
        alpha = jnp.exp(m_prev - m_new)
        p = jnp.exp(s - m_new)
        l_ref[...] = alpha * l_ref[...] + jnp.sum(p, axis=-1, keepdims=True)
        acc_ref[...] = alpha * acc_ref[...] + jnp.einsum(
            "hqk,hkd->hqd", p.astype(v.dtype), v,
            preferred_element_type=jnp.float32)
        m_ref[...] = m_new

    visible = k_first <= q_last                 # tile has >=1 unmasked element
    fully_visible = k_last <= q_first           # whole tile at/below diagonal -> no mask

    @pl.when(fully_visible)
    def _acc_nomask():
        _accumulate(False)

    @pl.when(jnp.logical_and(visible, jnp.logical_not(fully_visible)))
    def _acc_masked():
        _accumulate(True)

    @pl.when(ki == pl.num_programs(2) - 1)
    def _finalize():
        attn = acc_ref[...] * pl.reciprocal(l_ref[...], approx=True)   # (H, bq, hd) f32
        # merge heads back to (bq, C) — epilogue-only relayout, once per q tile
        y = jnp.concatenate([attn[hh] for hh in range(n_head)], axis=-1)
        y = jnp.dot(y.astype(jnp.bfloat16), wap_ref[...],
                    preferred_element_type=jnp.float32) + bap_ref[...]
        x1 = x_ref[...].astype(jnp.float32) + y                        # residual 1 (f32)

        h2 = _layernorm(x1, ln2w_ref[...], ln2b_ref[...]).astype(jnp.bfloat16)
        ff = jnp.dot(h2, wfc_ref[...],
                     preferred_element_type=jnp.float32) + bfc_ref[...]
        ff = _gelu_exact(ff).astype(jnp.bfloat16)
        ff = jnp.dot(ff, wmp_ref[...],
                     preferred_element_type=jnp.float32) + bmp_ref[...]
        o_ref[...] = (x1 + ff).astype(o_ref.dtype)                     # residual 2


# ---------------------------------------------------------------------------
# Wrapper
# ---------------------------------------------------------------------------
def gpt_block(x, params, n_head, *, block_q=256, block_kv=256):
    B, T, C = x.shape
    assert C % n_head == 0, "n_embd must be divisible by n_head"
    hd = C // n_head
    bq = min(block_q, T)
    bkv = min(block_kv, T)
    assert T % bq == 0 and T % bkv == 0, "T must be divisible by the tile sizes"
    nq, nk = T // bq, T // bkv

    bf16 = jnp.bfloat16
    # bf16 weights feed the MXU; biases / LN params stay f32 (added after f32 accumulation)
    w_qkv = params["w_qkv"].astype(bf16)
    w_ap = params["w_attn_proj"].astype(bf16)
    w_fc = params["w_fc"].astype(bf16)
    w_mp = params["w_mlp_proj"].astype(bf16)

    def const_spec(arr, grid_rank):
        # whole-array block with a constant index_map -> single-buffered (no 2x VMEM cost)
        idx = (lambda b, t: (0, 0)) if grid_rank == 2 else (lambda b, q, k: (0, 0))
        return pl.BlockSpec(arr.shape, idx, pipeline_mode=pl.Buffered(1))

    # ---- stage 1: LN1 + QKV projection ---------------------------------------------------
    qkv_out_shape = tuple(jax.ShapeDtypeStruct((B, n_head, T, hd), bf16) for _ in range(3))
    qkv_out_spec = pl.BlockSpec((pl.Squeezed(), n_head, bq, hd), lambda b, t: (b, 0, t, 0))
    q, k, v = pl.pallas_call(
        qkv_kernel,
        out_shape=qkv_out_shape,
        grid=(B, nq),
        in_specs=[
            pl.BlockSpec((pl.Squeezed(), bq, C), lambda b, t: (b, t, 0)),
            const_spec(params["ln1_w"], 2),
            const_spec(params["ln1_b"], 2),
            const_spec(w_qkv, 2),
            const_spec(params["b_qkv"], 2),
        ],
        out_specs=(qkv_out_spec, qkv_out_spec, qkv_out_spec),
        compiler_params=pltpu.CompilerParams(
            dimension_semantics=("parallel", "parallel"),
            vmem_limit_bytes=_VMEM_LIMIT_BYTES),
    )(x, params["ln1_w"], params["ln1_b"], w_qkv, params["b_qkv"])

    # KV tiles strictly above the causal diagonal are never used: clamp their block index
    # to the last useful tile so consecutive grid steps reuse the resident block (no DMA).
    def kv_index_map(b, qi, ki):
        last_valid = ((qi + 1) * bq - 1) // bkv
        return (b, 0, jnp.minimum(ki, last_valid), 0)

    # ---- stage 2: flash attention + proj + residual + MLP ---------------------------------
    out = pl.pallas_call(
        attn_mlp_kernel,
        out_shape=jax.ShapeDtypeStruct((B, T, C), x.dtype),
        grid=(B, nq, nk),
        in_specs=[
            pl.BlockSpec((pl.Squeezed(), bq, C), lambda b, qi, ki: (b, qi, 0)),             # x
            pl.BlockSpec((pl.Squeezed(), n_head, bq, hd), lambda b, qi, ki: (b, 0, qi, 0)),   # q
            pl.BlockSpec((pl.Squeezed(), n_head, bkv, hd), kv_index_map),                     # k
            pl.BlockSpec((pl.Squeezed(), n_head, bkv, hd), kv_index_map),                     # v
            const_spec(w_ap, 3),
            const_spec(params["b_attn_proj"], 3),
            const_spec(params["ln2_w"], 3),
            const_spec(params["ln2_b"], 3),
            const_spec(w_fc, 3),
            const_spec(params["b_fc"], 3),
            const_spec(w_mp, 3),
            const_spec(params["b_mlp_proj"], 3),
        ],
        out_specs=pl.BlockSpec((pl.Squeezed(), bq, C), lambda b, qi, ki: (b, qi, 0)),
        scratch_shapes=[
            pltpu.VMEM((n_head, bq, 1), jnp.float32),    # running max  m
            pltpu.VMEM((n_head, bq, 1), jnp.float32),    # running sum  l
            pltpu.VMEM((n_head, bq, hd), jnp.float32),   # output accumulator
        ],
        compiler_params=pltpu.CompilerParams(
            dimension_semantics=("parallel", "parallel", "arbitrary"),
            vmem_limit_bytes=_VMEM_LIMIT_BYTES),
    )(x, q, k, v,
      w_ap, params["b_attn_proj"], params["ln2_w"], params["ln2_b"],
      w_fc, params["b_fc"], w_mp, params["b_mlp_proj"])
    return out


# ---------------------------------------------------------------------------
# Pure-JAX f32 reference (same math) for a sanity check
# ---------------------------------------------------------------------------
def gpt_block_ref(x, p, n_head):
    def ln(t, w, b):
        mu = jnp.mean(t, -1, keepdims=True)
        var = jnp.mean((t - mu) ** 2, -1, keepdims=True)
        return (t - mu) * jax.lax.rsqrt(var + 1e-5) * w + b

    B, T, C = x.shape
    hd = C // n_head
    h = ln(x, p["ln1_w"], p["ln1_b"])
    qkv = h @ p["w_qkv"] + p["b_qkv"]
    q, k, v = jnp.split(qkv, 3, axis=-1)
    reshape_heads = lambda t: t.reshape(B, T, n_head, hd).transpose(0, 2, 1, 3)
    q, k, v = map(reshape_heads, (q, k, v))
    att = jnp.einsum("bhtd,bhsd->bhts", q, k) / math.sqrt(hd)
    mask = jnp.tril(jnp.ones((T, T), bool))
    att = jnp.where(mask, att, -jnp.inf)
    att = jax.nn.softmax(att, axis=-1)
    y = jnp.einsum("bhts,bhsd->bhtd", att, v).transpose(0, 2, 1, 3).reshape(B, T, C)
    x = x + (y @ p["w_attn_proj"] + p["b_attn_proj"])
    h2 = ln(x, p["ln2_w"], p["ln2_b"])
    ff = h2 @ p["w_fc"] + p["b_fc"]
    ff = 0.5 * ff * (1.0 + jax.lax.erf(ff / math.sqrt(2.0)))
    return x + (ff @ p["w_mlp_proj"] + p["b_mlp_proj"])


if __name__ == "__main__":
    key = jax.random.PRNGKey(0)
    # small but multi-tile config: n_embd=128, 4 heads (hd=32), seq=32, batch=2
    B, T, C, n_head = 2, 32, 128, 4
    ks = jax.random.split(key, 10)
    std = 0.02
    x = jax.random.normal(ks[0], (B, T, C), jnp.float32)

    params = dict(
        ln1_w=jnp.ones((1, C), jnp.float32),
        ln1_b=jnp.zeros((1, C), jnp.float32),
        # pre-transposed Linear weights: (in_features, out_features)
        w_qkv=std * jax.random.normal(ks[1], (C, 3 * C), jnp.float32),
        b_qkv=std * jax.random.normal(ks[2], (1, 3 * C), jnp.float32),
        w_attn_proj=std * jax.random.normal(ks[3], (C, C), jnp.float32),
        b_attn_proj=std * jax.random.normal(ks[4], (1, C), jnp.float32),
        ln2_w=jnp.ones((1, C), jnp.float32),
        ln2_b=jnp.zeros((1, C), jnp.float32),
        w_fc=std * jax.random.normal(ks[5], (C, 4 * C), jnp.float32),
        b_fc=std * jax.random.normal(ks[6], (1, 4 * C), jnp.float32),
        w_mlp_proj=std * jax.random.normal(ks[7], (4 * C, C), jnp.float32),
        b_mlp_proj=std * jax.random.normal(ks[8], (1, C), jnp.float32),
    )

    # small q/kv tiles so the multi-tile flash path (mask-free tiles, diagonal tiles and
    # skipped/clamped above-diagonal tiles) is actually exercised; realistic runs would
    # use the 256-row defaults.
    out = gpt_block(x, params, n_head, block_q=16, block_kv=16)
    jax.block_until_ready(out)

    ref = gpt_block_ref(x, params, n_head)
    # bf16 matmul inputs (f32 accumulation) loosen the tolerance vs the pure-f32 reference
    assert jnp.allclose(out, ref, atol=2e-2, rtol=2e-2), "mismatch vs pure-JAX reference"

    print("KERNEL_OK")
</pallas_src>

<mosaic_0001>
module attributes {stable_mosaic.version = 11 : i64} {
  func.func @qkv_kernel(%arg0: i32, %arg1: i32, %arg2: memref<1x16x128xf32, #tpu.memory_space<vmem>>, %arg3: memref<1x128xf32, #tpu.memory_space<vmem>>, %arg4: memref<1x128xf32, #tpu.memory_space<vmem>>, %arg5: memref<128x384xbf16, #tpu.memory_space<vmem>>, %arg6: memref<1x384xf32, #tpu.memory_space<vmem>>, %arg7: memref<1x4x16x32xbf16, #tpu.memory_space<vmem>>, %arg8: memref<1x4x16x32xbf16, #tpu.memory_space<vmem>>, %arg9: memref<1x4x16x32xbf16, #tpu.memory_space<vmem>>) attributes {dimension_semantics = [#tpu.dimension_semantics<parallel>, #tpu.dimension_semantics<parallel>], iteration_bounds = array<i64: 2, 2>, scalar_prefetch = 0 : i64, scratch_operands = 0 : i64, tpu.core_type = #tpu.core_type<tc>, window_params = [{transform_indices = @transform_0, window_bounds = array<i64: 1, 16, 128>}, {pipeline_mode = #tpu.pipeline_mode<synchronous>, transform_indices = @transform_1, window_bounds = array<i64: 1, 128>}, {pipeline_mode = #tpu.pipeline_mode<synchronous>, transform_indices = @transform_2, window_bounds = array<i64: 1, 128>}, {pipeline_mode = #tpu.pipeline_mode<synchronous>, transform_indices = @transform_3, window_bounds = array<i64: 128, 384>}, {pipeline_mode = #tpu.pipeline_mode<synchronous>, transform_indices = @transform_4, window_bounds = array<i64: 1, 384>}, {transform_indices = @transform_5, window_bounds = array<i64: 1, 4, 16, 32>}, {transform_indices = @transform_6, window_bounds = array<i64: 1, 4, 16, 32>}, {transform_indices = @transform_7, window_bounds = array<i64: 1, 4, 16, 32>}]} {
    %c0 = arith.constant 0 : index
    %c0_0 = arith.constant 0 : index
    %c0_1 = arith.constant 0 : index
    %0 = vector.load %arg2[%c0, %c0_0, %c0_1] : memref<1x16x128xf32, #tpu.memory_space<vmem>>, vector<1x16x128xf32>
    %1 = vector.shape_cast %0 : vector<1x16x128xf32> to vector<16x128xf32>
    %c0_2 = arith.constant 0 : index
    %c0_3 = arith.constant 0 : index
    %2 = vector.load %arg3[%c0_2, %c0_3] : memref<1x128xf32, #tpu.memory_space<vmem>>, vector<1x128xf32>
    %c0_4 = arith.constant 0 : index
    %c0_5 = arith.constant 0 : index
    %3 = vector.load %arg4[%c0_4, %c0_5] : memref<1x128xf32, #tpu.memory_space<vmem>>, vector<1x128xf32>
    %cst = arith.constant dense<0.000000e+00> : vector<16xf32>
    %4 = vector.multi_reduction <add>, %1, %cst [1] : vector<16x128xf32> to vector<16xf32>
    %5 = vector.shape_cast %4 : vector<16xf32> to vector<16x1xf32>
    %cst_6 = arith.constant 1.280000e+02 : f32
    %6 = vector.broadcast %cst_6 : f32 to vector<16x1xf32>
    %7 = arith.divf %5, %6 : vector<16x1xf32>
    %8 = vector.broadcast %7 : vector<16x1xf32> to vector<16x128xf32>
    %9 = arith.subf %1, %8 : vector<16x128xf32>
    %10 = arith.mulf %9, %9 : vector<16x128xf32>
    %cst_7 = arith.constant dense<0.000000e+00> : vector<16xf32>
    %11 = vector.multi_reduction <add>, %10, %cst_7 [1] : vector<16x128xf32> to vector<16xf32>
    %12 = vector.shape_cast %11 : vector<16xf32> to vector<16x1xf32>
    %cst_8 = arith.constant 1.280000e+02 : f32
    %13 = vector.broadcast %cst_8 : f32 to vector<16x1xf32>
    %14 = arith.divf %12, %13 : vector<16x1xf32>
    %cst_9 = arith.constant 9.99999974E-6 : f32
    %15 = vector.broadcast %cst_9 : f32 to vector<16x1xf32>
    %16 = arith.addf %14, %15 : vector<16x1xf32>
    %17 = math.rsqrt %16 : vector<16x1xf32>
    %18 = vector.broadcast %17 : vector<16x1xf32> to vector<16x128xf32>
    %19 = arith.mulf %9, %18 : vector<16x128xf32>
    %20 = vector.broadcast %2 : vector<1x128xf32> to vector<16x128xf32>
    %21 = arith.mulf %19, %20 : vector<16x128xf32>
    %22 = vector.broadcast %3 : vector<1x128xf32> to vector<16x128xf32>
    %23 = arith.addf %21, %22 : vector<16x128xf32>
    %24 = arith.truncf %23 : vector<16x128xf32> to vector<16x128xbf16>
    %c0_10 = arith.constant 0 : index
    %c0_11 = arith.constant 0 : index
    %25 = vector.load %arg5[%c0_10, %c0_11] : memref<128x384xbf16, #tpu.memory_space<vmem>>, vector<128x384xbf16>
    %cst_12 = arith.constant dense<0.000000e+00> : vector<16x384xf32>
    %26 = tpu.matmul %24, %25, %cst_12 {dimension_numbers = #tpu.dot_dimension_numbers<[1], [0], [0], [1], [0, 0, 1, 1], [], []>} : vector<16x128xbf16>, vector<128x384xbf16>, vector<16x384xf32> -> vector<16x384xf32>
    %c0_13 = arith.constant 0 : index
    %c0_14 = arith.constant 0 : index
    %27 = vector.load %arg6[%c0_13, %c0_14] : memref<1x384xf32, #tpu.memory_space<vmem>>, vector<1x384xf32>
    %28 = vector.broadcast %27 : vector<1x384xf32> to vector<16x384xf32>
    %29 = arith.addf %26, %28 : vector<16x384xf32>
    %30 = vector.extract_strided_slice %29 {offsets = [0, 0], sizes = [16, 128], strides = [1, 1]} : vector<16x384xf32> to vector<16x128xf32>
    %cst_15 = arith.constant 0.176776692 : f32
    %31 = vector.broadcast %cst_15 : f32 to vector<16x128xf32>
    %32 = arith.mulf %30, %31 : vector<16x128xf32>
    %33 = vector.extract_strided_slice %29 {offsets = [0, 128], sizes = [16, 128], strides = [1, 1]} : vector<16x384xf32> to vector<16x128xf32>
    %34 = vector.extract_strided_slice %29 {offsets = [0, 256], sizes = [16, 128], strides = [1, 1]} : vector<16x384xf32> to vector<16x128xf32>
    %35 = vector.extract_strided_slice %32 {offsets = [0, 0], sizes = [16, 32], strides = [1, 1]} : vector<16x128xf32> to vector<16x32xf32>
    %36 = arith.truncf %35 : vector<16x32xf32> to vector<16x32xbf16>
    %c0_16 = arith.constant 0 : index
    %c0_17 = arith.constant 0 : index
    %c0_18 = arith.constant 0 : index
    %c0_19 = arith.constant 0 : index
    %37 = vector.load %arg7[%c0_16, %c0_17, %c0_18, %c0_19] : memref<1x4x16x32xbf16, #tpu.memory_space<vmem>>, vector<1x1x16x32xbf16>
    %38 = vector.shape_cast %37 : vector<1x1x16x32xbf16> to vector<16x32xbf16>
    %39 = vector.shape_cast %36 : vector<16x32xbf16> to vector<1x1x16x32xbf16>
    tpu.vector_store %arg7[%c0_16, %c0_17, %c0_18, %c0_19], %39 {strides = array<i32>} : memref<1x4x16x32xbf16, #tpu.memory_space<vmem>>, vector<1x1x16x32xbf16>,
    %40 = vector.extract_strided_slice %33 {offsets = [0, 0], sizes = [16, 32], strides = [1, 1]} : vector<16x128xf32> to vector<16x32xf32>
    %41 = arith.truncf %40 : vector<16x32xf32> to vector<16x32xbf16>
    %c0_20 = arith.constant 0 : index
    %c0_21 = arith.constant 0 : index
    %c0_22 = arith.constant 0 : index
    %c0_23 = arith.constant 0 : index
    %42 = vector.load %arg8[%c0_20, %c0_21, %c0_22, %c0_23] : memref<1x4x16x32xbf16, #tpu.memory_space<vmem>>, vector<1x1x16x32xbf16>
    %43 = vector.shape_cast %42 : vector<1x1x16x32xbf16> to vector<16x32xbf16>
    %44 = vector.shape_cast %41 : vector<16x32xbf16> to vector<1x1x16x32xbf16>
    tpu.vector_store %arg8[%c0_20, %c0_21, %c0_22, %c0_23], %44 {strides = array<i32>} : memref<1x4x16x32xbf16, #tpu.memory_space<vmem>>, vector<1x1x16x32xbf16>,
    %45 = vector.extract_strided_slice %34 {offsets = [0, 0], sizes = [16, 32], strides = [1, 1]} : vector<16x128xf32> to vector<16x32xf32>
    %46 = arith.truncf %45 : vector<16x32xf32> to vector<16x32xbf16>
    %c0_24 = arith.constant 0 : index
    %c0_25 = arith.constant 0 : index
    %c0_26 = arith.constant 0 : index
    %c0_27 = arith.constant 0 : index
    %47 = vector.load %arg9[%c0_24, %c0_25, %c0_26, %c0_27] : memref<1x4x16x32xbf16, #tpu.memory_space<vmem>>, vector<1x1x16x32xbf16>
    %48 = vector.shape_cast %47 : vector<1x1x16x32xbf16> to vector<16x32xbf16>
    %49 = vector.shape_cast %46 : vector<16x32xbf16> to vector<1x1x16x32xbf16>
    tpu.vector_store %arg9[%c0_24, %c0_25, %c0_26, %c0_27], %49 {strides = array<i32>} : memref<1x4x16x32xbf16, #tpu.memory_space<vmem>>, vector<1x1x16x32xbf16>,
    %50 = vector.extract_strided_slice %32 {offsets = [0, 32], sizes = [16, 32], strides = [1, 1]} : vector<16x128xf32> to vector<16x32xf32>
    %51 = arith.truncf %50 : vector<16x32xf32> to vector<16x32xbf16>
    %c0_28 = arith.constant 0 : index
    %c1 = arith.constant 1 : index
    %c0_29 = arith.constant 0 : index
    %c0_30 = arith.constant 0 : index
    %52 = vector.load %arg7[%c0_28, %c1, %c0_29, %c0_30] : memref<1x4x16x32xbf16, #tpu.memory_space<vmem>>, vector<1x1x16x32xbf16>
    %53 = vector.shape_cast %52 : vector<1x1x16x32xbf16> to vector<16x32xbf16>
    %54 = vector.shape_cast %51 : vector<16x32xbf16> to vector<1x1x16x32xbf16>
    tpu.vector_store %arg7[%c0_28, %c1, %c0_29, %c0_30], %54 {strides = array<i32>} : memref<1x4x16x32xbf16, #tpu.memory_space<vmem>>, vector<1x1x16x32xbf16>,
    %55 = vector.extract_strided_slice %33 {offsets = [0, 32], sizes = [16, 32], strides = [1, 1]} : vector<16x128xf32> to vector<16x32xf32>
    %56 = arith.truncf %55 : vector<16x32xf32> to vector<16x32xbf16>
    %c0_31 = arith.constant 0 : index
    %c1_32 = arith.constant 1 : index
    %c0_33 = arith.constant 0 : index
    %c0_34 = arith.constant 0 : index
    %57 = vector.load %arg8[%c0_31, %c1_32, %c0_33, %c0_34] : memref<1x4x16x32xbf16, #tpu.memory_space<vmem>>, vector<1x1x16x32xbf16>
    %58 = vector.shape_cast %57 : vector<1x1x16x32xbf16> to vector<16x32xbf16>
    %59 = vector.shape_cast %56 : vector<16x32xbf16> to vector<1x1x16x32xbf16>
    tpu.vector_store %arg8[%c0_31, %c1_32, %c0_33, %c0_34], %59 {strides = array<i32>} : memref<1x4x16x32xbf16, #tpu.memory_space<vmem>>, vector<1x1x16x32xbf16>,
    %60 = vector.extract_strided_slice %34 {offsets = [0, 32], sizes = [16, 32], strides = [1, 1]} : vector<16x128xf32> to vector<16x32xf32>
    %61 = arith.truncf %60 : vector<16x32xf32> to vector<16x32xbf16>
    %c0_35 = arith.constant 0 : index
    %c1_36 = arith.constant 1 : index
    %c0_37 = arith.constant 0 : index
    %c0_38 = arith.constant 0 : index
    %62 = vector.load %arg9[%c0_35, %c1_36, %c0_37, %c0_38] : memref<1x4x16x32xbf16, #tpu.memory_space<vmem>>, vector<1x1x16x32xbf16>
    %63 = vector.shape_cast %62 : vector<1x1x16x32xbf16> to vector<16x32xbf16>
    %64 = vector.shape_cast %61 : vector<16x32xbf16> to vector<1x1x16x32xbf16>
    tpu.vector_store %arg9[%c0_35, %c1_36, %c0_37, %c0_38], %64 {strides = array<i32>} : memref<1x4x16x32xbf16, #tpu.memory_space<vmem>>, vector<1x1x16x32xbf16>,
    %65 = vector.extract_strided_slice %32 {offsets = [0, 64], sizes = [16, 32], strides = [1, 1]} : vector<16x128xf32> to vector<16x32xf32>
    %66 = arith.truncf %65 : vector<16x32xf32> to vector<16x32xbf16>
    %c0_39 = arith.constant 0 : index
    %c2 = arith.constant 2 : index
    %c0_40 = arith.constant 0 : index
    %c0_41 = arith.constant 0 : index
    %67 = vector.load %arg7[%c0_39, %c2, %c0_40, %c0_41] : memref<1x4x16x32xbf16, #tpu.memory_space<vmem>>, vector<1x1x16x32xbf16>
    %68 = vector.shape_cast %67 : vector<1x1x16x32xbf16> to vector<16x32xbf16>
    %69 = vector.shape_cast %66 : vector<16x32xbf16> to vector<1x1x16x32xbf16>
    tpu.vector_store %arg7[%c0_39, %c2, %c0_40, %c0_41], %69 {strides = array<i32>} : memref<1x4x16x32xbf16, #tpu.memory_space<vmem>>, vector<1x1x16x32xbf16>,
    %70 = vector.extract_strided_slice %33 {offsets = [0, 64], sizes = [16, 32], strides = [1, 1]} : vector<16x128xf32> to vector<16x32xf32>
    %71 = arith.truncf %70 : vector<16x32xf32> to vector<16x32xbf16>
    %c0_42 = arith.constant 0 : index
    %c2_43 = arith.constant 2 : index
    %c0_44 = arith.constant 0 : index
    %c0_45 = arith.constant 0 : index
    %72 = vector.load %arg8[%c0_42, %c2_43, %c0_44, %c0_45] : memref<1x4x16x32xbf16, #tpu.memory_space<vmem>>, vector<1x1x16x32xbf16>
    %73 = vector.shape_cast %72 : vector<1x1x16x32xbf16> to vector<16x32xbf16>
    %74 = vector.shape_cast %71 : vector<16x32xbf16> to vector<1x1x16x32xbf16>
    tpu.vector_store %arg8[%c0_42, %c2_43, %c0_44, %c0_45], %74 {strides = array<i32>} : memref<1x4x16x32xbf16, #tpu.memory_space<vmem>>, vector<1x1x16x32xbf16>,
    %75 = vector.extract_strided_slice %34 {offsets = [0, 64], sizes = [16, 32], strides = [1, 1]} : vector<16x128xf32> to vector<16x32xf32>
    %76 = arith.truncf %75 : vector<16x32xf32> to vector<16x32xbf16>
    %c0_46 = arith.constant 0 : index
    %c2_47 = arith.constant 2 : index
    %c0_48 = arith.constant 0 : index
    %c0_49 = arith.constant 0 : index
    %77 = vector.load %arg9[%c0_46, %c2_47, %c0_48, %c0_49] : memref<1x4x16x32xbf16, #tpu.memory_space<vmem>>, vector<1x1x16x32xbf16>
    %78 = vector.shape_cast %77 : vector<1x1x16x32xbf16> to vector<16x32xbf16>
    %79 = vector.shape_cast %76 : vector<16x32xbf16> to vector<1x1x16x32xbf16>
    tpu.vector_store %arg9[%c0_46, %c2_47, %c0_48, %c0_49], %79 {strides = array<i32>} : memref<1x4x16x32xbf16, #tpu.memory_space<vmem>>, vector<1x1x16x32xbf16>,
    %80 = vector.extract_strided_slice %32 {offsets = [0, 96], sizes = [16, 32], strides = [1, 1]} : vector<16x128xf32> to vector<16x32xf32>
    %81 = arith.truncf %80 : vector<16x32xf32> to vector<16x32xbf16>
    %c0_50 = arith.constant 0 : index
    %c3 = arith.constant 3 : index
    %c0_51 = arith.constant 0 : index
    %c0_52 = arith.constant 0 : index
    %82 = vector.load %arg7[%c0_50, %c3, %c0_51, %c0_52] : memref<1x4x16x32xbf16, #tpu.memory_space<vmem>>, vector<1x1x16x32xbf16>
    %83 = vector.shape_cast %82 : vector<1x1x16x32xbf16> to vector<16x32xbf16>
    %84 = vector.shape_cast %81 : vector<16x32xbf16> to vector<1x1x16x32xbf16>
    tpu.vector_store %arg7[%c0_50, %c3, %c0_51, %c0_52], %84 {strides = array<i32>} : memref<1x4x16x32xbf16, #tpu.memory_space<vmem>>, vector<1x1x16x32xbf16>,
    %85 = vector.extract_strided_slice %33 {offsets = [0, 96], sizes = [16, 32], strides = [1, 1]} : vector<16x128xf32> to vector<16x32xf32>
    %86 = arith.truncf %85 : vector<16x32xf32> to vector<16x32xbf16>
    %c0_53 = arith.constant 0 : index
    %c3_54 = arith.constant 3 : index
    %c0_55 = arith.constant 0 : index
    %c0_56 = arith.constant 0 : index
    %87 = vector.load %arg8[%c0_53, %c3_54, %c0_55, %c0_56] : memref<1x4x16x32xbf16, #tpu.memory_space<vmem>>, vector<1x1x16x32xbf16>
    %88 = vector.shape_cast %87 : vector<1x1x16x32xbf16> to vector<16x32xbf16>
    %89 = vector.shape_cast %86 : vector<16x32xbf16> to vector<1x1x16x32xbf16>
    tpu.vector_store %arg8[%c0_53, %c3_54, %c0_55, %c0_56], %89 {strides = array<i32>} : memref<1x4x16x32xbf16, #tpu.memory_space<vmem>>, vector<1x1x16x32xbf16>,
    %90 = vector.extract_strided_slice %34 {offsets = [0, 96], sizes = [16, 32], strides = [1, 1]} : vector<16x128xf32> to vector<16x32xf32>
    %91 = arith.truncf %90 : vector<16x32xf32> to vector<16x32xbf16>
    %c0_57 = arith.constant 0 : index
    %c3_58 = arith.constant 3 : index
    %c0_59 = arith.constant 0 : index
    %c0_60 = arith.constant 0 : index
    %92 = vector.load %arg9[%c0_57, %c3_58, %c0_59, %c0_60] : memref<1x4x16x32xbf16, #tpu.memory_space<vmem>>, vector<1x1x16x32xbf16>
    %93 = vector.shape_cast %92 : vector<1x1x16x32xbf16> to vector<16x32xbf16>
    %94 = vector.shape_cast %91 : vector<16x32xbf16> to vector<1x1x16x32xbf16>
    tpu.vector_store %arg9[%c0_57, %c3_58, %c0_59, %c0_60], %94 {strides = array<i32>} : memref<1x4x16x32xbf16, #tpu.memory_space<vmem>>, vector<1x1x16x32xbf16>,
    return
  }
  func.func @transform_0(%arg0: i32, %arg1: i32) -> (i32, i32, i32) {
    %c0_i32 = arith.constant 0 : i32
    %c0_i32_0 = arith.constant 0 : i32
    return %arg0, %arg1, %c0_i32 : i32, i32, i32
  }
  func.func @transform_1(%arg0: i32, %arg1: i32) -> (i32, i32) {
    %c0_i32 = arith.constant 0 : i32
    %c0_i32_0 = arith.constant 0 : i32
    %c0_i32_1 = arith.constant 0 : i32
    return %c0_i32, %c0_i32_0 : i32, i32
  }
  func.func @transform_2(%arg0: i32, %arg1: i32) -> (i32, i32) {
    %c0_i32 = arith.constant 0 : i32
    %c0_i32_0 = arith.constant 0 : i32
    %c0_i32_1 = arith.constant 0 : i32
    return %c0_i32, %c0_i32_0 : i32, i32
  }
  func.func @transform_3(%arg0: i32, %arg1: i32) -> (i32, i32) {
    %c0_i32 = arith.constant 0 : i32
    %c0_i32_0 = arith.constant 0 : i32
    %c0_i32_1 = arith.constant 0 : i32
    return %c0_i32, %c0_i32_0 : i32, i32
  }
  func.func @transform_4(%arg0: i32, %arg1: i32) -> (i32, i32) {
    %c0_i32 = arith.constant 0 : i32
    %c0_i32_0 = arith.constant 0 : i32
    %c0_i32_1 = arith.constant 0 : i32
    return %c0_i32, %c0_i32_0 : i32, i32
  }
  func.func @transform_5(%arg0: i32, %arg1: i32) -> (i32, i32, i32, i32) {
    %c0_i32 = arith.constant 0 : i32
    %c0_i32_0 = arith.constant 0 : i32
    %c0_i32_1 = arith.constant 0 : i32
    return %arg0, %c0_i32, %arg1, %c0_i32_0 : i32, i32, i32, i32
  }
  func.func @transform_6(%arg0: i32, %arg1: i32) -> (i32, i32, i32, i32) {
    %c0_i32 = arith.constant 0 : i32
    %c0_i32_0 = arith.constant 0 : i32
    %c0_i32_1 = arith.constant 0 : i32
    return %arg0, %c0_i32, %arg1, %c0_i32_0 : i32, i32, i32, i32
  }
  func.func @transform_7(%arg0: i32, %arg1: i32) -> (i32, i32, i32, i32) {
    %c0_i32 = arith.constant 0 : i32
    %c0_i32_0 = arith.constant 0 : i32
    %c0_i32_1 = arith.constant 0 : i32
    return %arg0, %c0_i32, %arg1, %c0_i32_0 : i32, i32, i32, i32
  }
}

</mosaic_0001>

<llo_original>
// kernel: tpu_custom_call.1
$region0: #{tpu_custom_call.1}
  #allocation0 [shape = 'u32[]', space=smem, size = 0x4, offset = 0x4, fixed_abs, tag = 'smem constant byte address 0x4 - core index']
  #allocation1 [shape = 'u32[144,128]{1,0:T(1,128)}', space=vmem, size = 0x12000, scoped, tag = 'internal scratch']
  #allocation11 [shape = 's32[]', space=sflag, size = 0x4, offset = 0, fixed_abs, tag = 'sflag constant byte address 0x0 - dummy sync flag']
  #allocation13 [shape = 's32[]', space=sflag, size = 0x4, offset = 0, fixed_abs, tag = 'sflag constant byte address 0x0 - dummy sync flag']
  #allocation15 [shape = 's32[]', space=sflag, size = 0x4, offset = 0, fixed_abs, tag = 'sflag constant byte address 0x0 - dummy sync flag']
  %s0 = inlined_call_operand.hbm [shape: f32[2,32,128], index: 0, kind: input, shape index: {}]
  %s1 = inlined_call_operand.vmem [shape: f32[1,128], index: 1, kind: input, shape index: {}]
  %s2 = inlined_call_operand.vmem [shape: f32[1,128], index: 2, kind: input, shape index: {}]
  %s3 = inlined_call_operand.hbm [shape: bf16[128,384], index: 3, kind: input, shape index: {}]
  %s4 = inlined_call_operand.vmem [shape: f32[1,384], index: 4, kind: input, shape index: {}]
  %s5 = inlined_call_operand.hbm [shape: bf16[2,4,32,32], index: 5, kind: output, shape index: {0}]
  %s6 = inlined_call_operand.hbm [shape: bf16[2,4,32,32], index: 6, kind: output, shape index: {1}]
  %s7 = inlined_call_operand.hbm [shape: bf16[2,4,32,32], index: 7, kind: output, shape index: {2}]
  %8 = xla_tuple %s5, %s6, %s7
  %s9 = sld [smem:[#allocation0]]
  $region77: #{tpu_custom_call.1} parent=0
    _
  %s11 = ssub.s32 1, %s9
  %s12 = scalar_select 0, %s11, %s9
  $region1: #{tpu_custom_call.1} parent=0
    #allocation2 [shape = 'u8[16384]{0}', space=vmem, size = 0x4000, scoped, tag = 'input window, operand 0']
    #allocation3 [shape = 's32[2]{0}', space=sflag, size = 0x8, scoped, tag = 'scoped memory for tpu_custom_call.1']
    #allocation4 [shape = 's32[2]{0}', space=sflag, size = 0x8, scoped, tag = 'scoped memory for tpu_custom_call.1']
    #allocation5 [shape = 'u8[98304]{0}', space=vmem, size = 0x18000, scoped, tag = 'input window, operand 3, single buffered']
    #allocation6 [shape = 's32[1]{0}', space=sflag, size = 0x4, scoped, tag = 'scoped memory for tpu_custom_call.1']
    #allocation7 [shape = 'u8[32768]{0}', space=vmem, size = 0x8000, scoped, tag = 'output window, operand 0']
    #allocation8 [shape = 'u8[32768]{0}', space=vmem, size = 0x8000, scoped, tag = 'output window, operand 1']
    #allocation9 [shape = 's32[2]{0}', space=sflag, size = 0x8, scoped, tag = 'scoped memory for tpu_custom_call.1']
    #allocation10 [shape = 'u8[32768]{0}', space=vmem, size = 0x8000, scoped, tag = 'output window, operand 2']
    %13 = vsyncpa [#allocation3], 0
    %s14 = scalar_lea.sflag [#allocation3], 1
    %15 = vsyncpa %s14, 0
    %16 = vsyncpa [#allocation6], 0
    %17 = vsyncpa [#allocation4], 0
    %s18 = scalar_lea.sflag [#allocation4], 1
    %19 = vsyncpa %s18, 0
    %20 = vsyncpa [#allocation9], 0
    %s21 = scalar_lea.sflag [#allocation9], 1
    %22 = vsyncpa %s21, 0
    loop: start=0, step=1, limit=6
    $region2: #{tpu_custom_call.1} parent=1 // loop_pre_header
      _
    $region3: #{tpu_custom_call.1} parent=1 // loop_header
      %s24 = sphi 0, %s28
      %p25 = scmp.ge.s32.totalorder %s24, 6
      %s31 = sphi 0, %s43
      %s32 = sphi 0, %s39
      %s33 = sphi 0, %s31
      %s34 = sphi 0, %s32
      %s35 = sphi 0, %s33
      %s36 = sphi 0, %s34
      %s48 = sphi 0, %s50
      %s51 = sphi 0, %s48
      %s52 = sphi 0, %s51
      %s68 = sphi 0, %s52
      %s72 = sphi 0, %s72
      %s74 = sphi 0, %s72
      %s75 = sphi 0, %s74
      %s89 = sphi 0, %s75
      %s93 = sphi 0, %s93
      %s95 = sphi 0, %s93
      %s96 = sphi 0, %s95
      %s110 = sphi 0, %s96
      %s114 = sphi 0, %s114
      %s116 = sphi 0, %s114
      %s117 = sphi 0, %s116
      %s131 = sphi 0, %s117
      %s135 = sphi 0, %s135
      %s137 = sphi 0, %s135
      %s138 = sphi 0, %s137
      %s152 = sphi 0, %s138
      %s160 = sphi 0, %s162
      %s163 = sphi 0, %s160
      %s164 = sphi 0, %s163
      %s180 = sphi 0, %s164
      %s188 = sphi 0, %s190
      %s191 = sphi 0, %s188
      %s192 = sphi 0, %s191
      %s208 = sphi 0, %s192
      %s216 = sphi 0, %s218
      %s219 = sphi 0, %s216
      %s220 = sphi 0, %s219
      %s236 = sphi 0, %s220
    $region4: #{tpu_custom_call.1} parent=1 // loop_header_branch
      %27 = sbr.rel (%p25) target = $region8
    $region5: #{tpu_custom_call.1} parent=1 // loop_body
      %s29 = ssub.s32 %s24, 1
      %s30 = ssub.s32 %s24, 2
      %s37 = sadd.s32 1, %s32
      %p38 = scmp.ge.s32.totalorder %s37, 2
      %s39 = scalar_select %p38, 0, %s37
      %s40 = sadd.s32 1, %s31
      %s41 = scalar_select %p38, %s40, %s31
      %p42 = scmp.ge.s32.totalorder %s41, 2
      %s43 = scalar_select %p42, 0, %s41
      %s44 = ssub.s32 %s31, %s43
      %s45 = ssub.s32 %s32, %s39
      %s46 = sor.u32 %s44, %s45
      %p47 = scmp.eq.s32.totalorder %s46, 0
      %s49 = sadd.s32 %s48, 1
      %s50 = scalar_select %p47, %s48, %s49
      %p53 = pneg %p47
      %p54 = scmp.eq.s32.totalorder %s24, 3
      %p55 = por %p53, %p54
      %p56 = scmp.ne.s32.totalorder %s48, %s51
      %p57 = scmp.eq.s32.totalorder %s24, 0
      %p58 = por %p56, %p57
      %p59 = scmp.ne.s32.totalorder %s48, %s51
      %p60 = scmp.eq.s32.totalorder %s29, 3
      %p61 = por %p59, %p60
      %p62 = scmp.ne.s32.totalorder %s51, %s52
      %p63 = scmp.eq.s32.totalorder %s29, 0
      %p64 = por %p62, %p63
      %p65 = scmp.ne.s32.totalorder %s51, %s52
      %p66 = scmp.eq.s32.totalorder %s30, 3
      %p67 = por %p65, %p66
      %p69 = scmp.ne.s32.totalorder %s52, %s68
      %p70 = scmp.eq.s32.totalorder %s30, 0
      %p71 = por %p69, %p70
      %s73 = sadd.s32 %s72, 1
      %p76 = scmp.eq.s32.totalorder %s24, 3
      %p77 = scmp.ne.s32.totalorder %s72, %s74
      %p78 = scmp.eq.s32.totalorder %s24, 0
      %p79 = por %p77, %p78
      %p80 = scmp.ne.s32.totalorder %s72, %s74
      %p81 = scmp.eq.s32.totalorder %s29, 3
      %p82 = por %p80, %p81
      %p83 = scmp.ne.s32.totalorder %s74, %s75
      %p84 = scmp.eq.s32.totalorder %s29, 0
      %p85 = por %p83, %p84
      %p86 = scmp.ne.s32.totalorder %s74, %s75
      %p87 = scmp.eq.s32.totalorder %s30, 3
      %p88 = por %p86, %p87
      %p90 = scmp.ne.s32.totalorder %s75, %s89
      %p91 = scmp.eq.s32.totalorder %s30, 0
      %p92 = por %p90, %p91
      %s94 = sadd.s32 %s93, 1
      %p97 = scmp.eq.s32.totalorder %s24, 3
      %p98 = scmp.ne.s32.totalorder %s93, %s95
      %p99 = scmp.eq.s32.totalorder %s24, 0
      %p100 = por %p98, %p99
      %p101 = scmp.ne.s32.totalorder %s93, %s95
      %p102 = scmp.eq.s32.totalorder %s29, 3
      %p103 = por %p101, %p102
      %p104 = scmp.ne.s32.totalorder %s95, %s96
      %p105 = scmp.eq.s32.totalorder %s29, 0
      %p106 = por %p104, %p105
      %p107 = scmp.ne.s32.totalorder %s95, %s96
      %p108 = scmp.eq.s32.totalorder %s30, 3
      %p109 = por %p107, %p108
      %p111 = scmp.ne.s32.totalorder %s96, %s110
      %p112 = scmp.eq.s32.totalorder %s30, 0
      %p113 = por %p111, %p112
      %s115 = sadd.s32 %s114, 1
      %p118 = scmp.eq.s32.totalorder %s24, 3
      %p119 = scmp.ne.s32.totalorder %s114, %s116
      %p120 = scmp.eq.s32.totalorder %s24, 0
      %p121 = por %p119, %p120
      %p122 = scmp.ne.s32.totalorder %s114, %s116
      %p123 = scmp.eq.s32.totalorder %s29, 3
      %p124 = por %p122, %p123
      %p125 = scmp.ne.s32.totalorder %s116, %s117
      %p126 = scmp.eq.s32.totalorder %s29, 0
      %p127 = por %p125, %p126
      %p128 = scmp.ne.s32.totalorder %s116, %s117
      %p129 = scmp.eq.s32.totalorder %s30, 3
      %p130 = por %p128, %p129
      %p132 = scmp.ne.s32.totalorder %s117, %s131
      %p133 = scmp.eq.s32.totalorder %s30, 0
      %p134 = por %p132, %p133
      %s136 = sadd.s32 %s135, 1
      %p139 = scmp.eq.s32.totalorder %s24, 3
      %p140 = scmp.ne.s32.totalorder %s135, %s137
      %p141 = scmp.eq.s32.totalorder %s24, 0
      %p142 = por %p140, %p141
      %p143 = scmp.ne.s32.totalorder %s135, %s137
      %p144 = scmp.eq.s32.totalorder %s29, 3
      %p145 = por %p143, %p144
      %p146 = scmp.ne.s32.totalorder %s137, %s138
      %p147 = scmp.eq.s32.totalorder %s29, 0
      %p148 = por %p146, %p147
      %p149 = scmp.ne.s32.totalorder %s137, %s138
      %p150 = scmp.eq.s32.totalorder %s30, 3
      %p151 = por %p149, %p150
      %p153 = scmp.ne.s32.totalorder %s138, %s152
      %p154 = scmp.eq.s32.totalorder %s30, 0
      %p155 = por %p153, %p154
      %s156 = ssub.s32 %s31, %s43
      %s157 = ssub.s32 %s32, %s39
      %s158 = sor.u32 %s156, %s157
      %p159 = scmp.eq.s32.totalorder %s158, 0
      %s161 = sadd.s32 %s160, 1
      %s162 = scalar_select %p159, %s160, %s161
      %p165 = pneg %p159
      %p166 = scmp.eq.s32.totalorder %s24, 3
      %p167 = por %p165, %p166
      %p168 = scmp.ne.s32.totalorder %s160, %s163
      %p169 = scmp.eq.s32.totalorder %s24, 0
      %p170 = por %p168, %p169
      %p171 = scmp.ne.s32.totalorder %s160, %s163
      %p172 = scmp.eq.s32.totalorder %s29, 3
      %p173 = por %p171, %p172
      %p174 = scmp.ne.s32.totalorder %s163, %s164
      %p175 = scmp.eq.s32.totalorder %s29, 0
      %p176 = por %p174, %p175
      %p177 = scmp.ne.s32.totalorder %s163, %s164
      %p178 = scmp.eq.s32.totalorder %s30, 3
      %p179 = por %p177, %p178
      %p181 = scmp.ne.s32.totalorder %s164, %s180
      %p182 = scmp.eq.s32.totalorder %s30, 0
      %p183 = por %p181, %p182
      %s184 = ssub.s32 %s31, %s43
      %s185 = ssub.s32 %s32, %s39
      %s186 = sor.u32 %s184, %s185
      %p187 = scmp.eq.s32.totalorder %s186, 0
      %s189 = sadd.s32 %s188, 1
      %s190 = scalar_select %p187, %s188, %s189
      %p193 = pneg %p187
      %p194 = scmp.eq.s32.totalorder %s24, 3
      %p195 = por %p193, %p194
      %p196 = scmp.ne.s32.totalorder %s188, %s191
      %p197 = scmp.eq.s32.totalorder %s24, 0
      %p198 = por %p196, %p197
      %p199 = scmp.ne.s32.totalorder %s188, %s191
      %p200 = scmp.eq.s32.totalorder %s29, 3
      %p201 = por %p199, %p200
      %p202 = scmp.ne.s32.totalorder %s191, %s192
      %p203 = scmp.eq.s32.totalorder %s29, 0
      %p204 = por %p202, %p203
      %p205 = scmp.ne.s32.totalorder %s191, %s192
      %p206 = scmp.eq.s32.totalorder %s30, 3
      %p207 = por %p205, %p206
      %p209 = scmp.ne.s32.totalorder %s192, %s208
      %p210 = scmp.eq.s32.totalorder %s30, 0
      %p211 = por %p209, %p210
      %s212 = ssub.s32 %s31, %s43
      %s213 = ssub.s32 %s32, %s39
      %s214 = sor.u32 %s212, %s213
      %p215 = scmp.eq.s32.totalorder %s214, 0
      %s217 = sadd.s32 %s216, 1
      %s218 = scalar_select %p215, %s216, %s217
      %p221 = pneg %p215
      %p222 = scmp.eq.s32.totalorder %s24, 3
      %p223 = por %p221, %p222
      %p224 = scmp.ne.s32.totalorder %s216, %s219
      %p225 = scmp.eq.s32.totalorder %s24, 0
      %p226 = por %p224, %p225
      %p227 = scmp.ne.s32.totalorder %s216, %s219
      %p228 = scmp.eq.s32.totalorder %s29, 3
      %p229 = por %p227, %p228
      %p230 = scmp.ne.s32.totalorder %s219, %s220
      %p231 = scmp.eq.s32.totalorder %s29, 0
      %p232 = por %p230, %p231
      %p233 = scmp.ne.s32.totalorder %s219, %s220
      %p234 = scmp.eq.s32.totalorder %s30, 3
      %p235 = por %p233, %p234
      %p237 = scmp.ne.s32.totalorder %s220, %s236
      %p238 = scmp.eq.s32.totalorder %s30, 0
      %p239 = por %p237, %p238
      %p240 = scmp.le.s32.totalorder 1, %s24
      %p241 = scmp.lt.s32.totalorder %s24, 5
      %p242 = pnand %p240, %p241
      %p243 = pneg %p242
      // Predicated region
      $region9: #{tpu_custom_call.1} parent=5 // pred_check
        _
      $region10: #{tpu_custom_call.1} parent=5 // pred_check_branch
        %245 = sbr.rel (%p242) target = $region12
      $region11: #{tpu_custom_call.1} parent=5 // pred_region
        %s246 = ssub.s32 %s24, 1
        // Predicated region
        $region13: #{tpu_custom_call.1} parent=11 // pred_check
          %p247 = pneg %p85
        $region14: #{tpu_custom_call.1} parent=11 // pred_check_branch
          %249 = sbr.rel (%p247) target = $region16
        $region15: #{tpu_custom_call.1} parent=11 // pred_region
          _
        $region16: #{tpu_custom_call.1} parent=11 // pred_fallthru
          _
        // Predicated region
        $region17: #{tpu_custom_call.1} parent=11 // pred_check
          %p250 = pneg %p106
        $region18: #{tpu_custom_call.1} parent=11 // pred_check_branch
          %252 = sbr.rel (%p250) target = $region20
        $region19: #{tpu_custom_call.1} parent=11 // pred_region
          _
        $region20: #{tpu_custom_call.1} parent=11 // pred_fallthru
          _
        // Predicated region
        $region21: #{tpu_custom_call.1} parent=11 // pred_check
          %p253 = pneg %p127
        $region22: #{tpu_custom_call.1} parent=11 // pred_check_branch
          %255 = sbr.rel (%p253) target = $region24
        $region23: #{tpu_custom_call.1} parent=11 // pred_region
          %s257 = ssub.s32 3072, 3072
          %258 = vsyncadd [#allocation6], %s257
          %s259 = sshll.u32 [#allocation5], 4
          %s260 = int_to_ptr.vmem [resolvable:$true] %s259
          %265 = dma.hbm_to_vmem [thread:$0]  %s3, 3072, %s260, [#allocation6], 192, 192, 12
        $region24: #{tpu_custom_call.1} parent=11 // pred_fallthru
          _
        // Predicated region
        $region25: #{tpu_custom_call.1} parent=11 // pred_check
          %p266 = pneg %p148
        $region26: #{tpu_custom_call.1} parent=11 // pred_check_branch
          %268 = sbr.rel (%p266) target = $region28
        $region27: #{tpu_custom_call.1} parent=11 // pred_region
          _
        $region28: #{tpu_custom_call.1} parent=11 // pred_fallthru
          _
      $region12: #{tpu_custom_call.1} parent=5 // pred_fallthru
        _
      %p269 = scmp.lt.s32.totalorder %s24, 4
      // Predicated region
      $region29: #{tpu_custom_call.1} parent=5 // pred_check
        %p270 = pneg %p269
      $region30: #{tpu_custom_call.1} parent=5 // pred_check_branch
        %272 = sbr.rel (%p270) target = $region32
      $region31: #{tpu_custom_call.1} parent=5 // pred_region
        // Predicated region
        $region33: #{tpu_custom_call.1} parent=31 // pred_check
          %p273 = pneg %p58
        $region34: #{tpu_custom_call.1} parent=31 // pred_check_branch
          %275 = sbr.rel (%p273) target = $region36
        $region35: #{tpu_custom_call.1} parent=31 // pred_region
          %s276 = sand.u32 %s48, 1
          %s277 = scalar_lea.sflag [#allocation3], %s276
          %s278 = sand.u32 %s48, 1
          %s279 = smul.addr %s278, 16
          %s280 = scalar_lea.vmem [#allocation2], %s279
          %s281 = smul.u32 2, %s32
          %s283 = ssub.s32 256, 256
          %284 = vsyncadd %s277, %s283
          %s285 = smul.addr %s31, 4
          %s286 = sadd.s32 %s281, %s285
          %s287 = smul.addr %s286, 128
          %s288 = scalar_lea.hbm %s0, %s287
          %s289 = sshll.u32 %s280, 4
          %s290 = int_to_ptr.vmem [resolvable:$true] %s289
          %295 = dma.hbm_to_vmem [thread:$0]  %s288, 256, %s290, %s277, 128, 128, 8
        $region36: #{tpu_custom_call.1} parent=31 // pred_fallthru
          _
      $region32: #{tpu_custom_call.1} parent=5 // pred_fallthru
        _
      %p296 = scmp.le.s32.totalorder 1, %s24
      %p297 = scmp.lt.s32.totalorder %s24, 5
      %p298 = pnand %p296, %p297
      %p299 = pneg %p298
      // Predicated region
      $region37: #{tpu_custom_call.1} parent=5 // pred_check
        _
      $region38: #{tpu_custom_call.1} parent=5 // pred_check_branch
        %301 = sbr.rel (%p298) target = $region40
      $region39: #{tpu_custom_call.1} parent=5 // pred_region
        %s302 = ssub.s32 %s24, 1
        %s303 = sand.u32 %s51, 1
        %s304 = scalar_lea.sflag [#allocation3], %s303
        %s305 = sand.u32 %s51, 1
        %s306 = smul.addr %s305, 16
        %s307 = scalar_lea.vmem [#allocation2], %s306
        // Predicated region
        $region41: #{tpu_custom_call.1} parent=39 // pred_check
          %p308 = pneg %p64
        $region42: #{tpu_custom_call.1} parent=39 // pred_check_branch
          %310 = sbr.rel (%p308) target = $region44
        $region43: #{tpu_custom_call.1} parent=39 // pred_region
          %311 = dma.done %s304, 256
        $region44: #{tpu_custom_call.1} parent=39 // pred_fallthru
          _
        // Predicated region
        $region45: #{tpu_custom_call.1} parent=39 // pred_check
          %p312 = pneg %p127
        $region46: #{tpu_custom_call.1} parent=39 // pred_check_branch
          %314 = sbr.rel (%p312) target = $region48
        $region47: #{tpu_custom_call.1} parent=39 // pred_region
          %315 = dma.done [#allocation6], 3072
        $region48: #{tpu_custom_call.1} parent=39 // pred_fallthru
          _
        %s316 = sand.u32 %s51, 1
        %s317 = scalar_lea.sflag [#allocation3], %s316
        %s318 = sand.u32 %s51, 1
        %s319 = smul.addr %s318, 16
        %s320 = scalar_lea.vmem [#allocation2], %s319
        %p321 = pneg %p64
        %p322 = pneg %p61
        %p323 = pneg %p85
        %p324 = pneg %p82
        %p325 = pneg %p106
        %p326 = pneg %p103
        %p327 = pneg %p127
        %p328 = pneg %p124
        %p329 = pneg %p148
        %p330 = pneg %p145
        %p331 = pneg %p176
        %p332 = pneg %p173
        %s333 = sand.u32 %s163, 1
        %s334 = scalar_lea.sflag [#allocation4], %s333
        %s335 = sand.u32 %s163, 1
        %s336 = smul.addr %s335, 32
        %s337 = scalar_lea.vmem [#allocation7], %s336
        %p338 = pneg %p204
        %p339 = pneg %p201
        %s340 = sand.u32 %s29, 1
        %s341 = scalar_lea.sflag [#allocation9], %s340
        %s342 = sand.u32 %s191, 1
        %s343 = smul.addr %s342, 32
        %s344 = scalar_lea.vmem [#allocation8], %s343
        %p345 = pneg %p232
        %p346 = pneg %p229
        %s347 = sand.u32 %s29, 1
        %s348 = scalar_lea.sflag [#allocation9], %s347
        %s349 = sand.u32 %s219, 1
        %s350 = smul.addr %s349, 32
        %s351 = scalar_lea.vmem [#allocation10], %s350
        %s352 = smul.u32 2, %s34
        %s353 = smul.u32 2, %s34
        %s354 = smul.u32 2, %s34
        %s355 = smul.u32 2, %s34
        %v357 = vld [vmem:[%s307] sm:$0xff]
        %v358 = vld [vmem:[%s307 + $0x8] sm:$0xff]
        %v359 = vld [vmem:[%s1] sm:$0x1]
        %v360 = vld [vmem:[%s2] sm:$0x1]
        %361 = vadd.xlane.f32.xlu0 %v357
        %v362 = vpop.xlane.xlu0 %361
        %363 = vadd.xlane.f32.xlu0 %v358
        %v364 = vpop.xlane.xlu0 %363
        %v365 = vrcp.pop 128.0
        %v366 = vmul.f32 %v362, %v365
        %v367 = vmul.f32 %v364, %v365
        %v368 = vsub.f32 %v357, %v366
        %v369 = vsub.f32 %v358, %v367
        %v370 = vmul.f32 %v368, %v368
        %v371 = vmul.f32 %v369, %v369
        %372 = vadd.xlane.f32.xlu0 %v370
        %v373 = vpop.xlane.xlu0 %372
        %374 = vadd.xlane.f32.xlu0 %v371
        %v375 = vpop.xlane.xlu0 %374
        %v376 = vmul.f32 %v373, %v365
        %v377 = vmul.f32 %v375, %v365
        %v378 = vadd.f32 %v376, 1e-05
        %v379 = vadd.f32 %v377, 1e-05
        %v380 = vrsqrt.pop %v378
        %v381 = vrsqrt.pop %v379
        %v382 = vmul.f32 %v368, %v380
        %v383 = vmul.f32 %v369, %v381
        %v385 = vlaneseq
        %v386 = vshrl.u32 %v385, 7
        %v387 = vsub.s32 0, %v386
        %v388 = vrot.slane %v359, %v387
        %v390 = vmul.f32 %v382, %v388
        %v391 = vmul.f32 %v383, %v388
        %v393 = vlaneseq
        %v394 = vshrl.u32 %v393, 7
        %v395 = vsub.s32 0, %v394
        %v396 = vrot.slane %v360, %v395
        %v398 = vadd.f32 %v390, %v396
        %v399 = vadd.f32 %v391, %v396
        %v400 = vpack.c.bf16 %v399, %v398
        %v401 = vld [vmem:[#allocation5] sm:$0xff]
        %v402 = vld [vmem:[#allocation5 + $0x8] sm:$0xf]
        %v403 = vld [vmem:[#allocation5 + $0xc] sm:$0xff]
        %v404 = vld [vmem:[#allocation5 + $0x14] sm:$0xf]
        %v405 = vld [vmem:[#allocation5 + $0x18] sm:$0xff]
        %v406 = vld [vmem:[#allocation5 + $0x20] sm:$0xf]
        %v407 = vld [vmem:[#allocation5 + $0x24] sm:$0xff]
        %v408 = vld [vmem:[#allocation5 + $0x2c] sm:$0xf]
        %v409 = vld [vmem:[#allocation5 + $0x30] sm:$0xff]
        %v410 = vld [vmem:[#allocation5 + $0x38] sm:$0xf]
        %v411 = vld [vmem:[#allocation5 + $0x3c] sm:$0xff]
        %v412 = vld [vmem:[#allocation5 + $0x44] sm:$0xf]
        %v413 = vld [vmem:[#allocation5 + $0x48] sm:$0xff]
        %v414 = vld [vmem:[#allocation5 + $0x50] sm:$0xf]
        %v415 = vld [vmem:[#allocation5 + $0x54] sm:$0xff]
        %v416 = vld [vmem:[#allocation5 + $0x5c] sm:$0xf]
        %v417 = vld [vmem:[#allocation5 + $0x60] sm:$0xff]
        %v418 = vld [vmem:[#allocation5 + $0x68] sm:$0xf]
        %v419 = vld [vmem:[#allocation5 + $0x6c] sm:$0xff]
        %v420 = vld [vmem:[#allocation5 + $0x74] sm:$0xf]
        %v421 = vld [vmem:[#allocation5 + $0x78] sm:$0xff]
        %v422 = vld [vmem:[#allocation5 + $0x80] sm:$0xf]
        %v423 = vld [vmem:[#allocation5 + $0x84] sm:$0xff]
        %v424 = vld [vmem:[#allocation5 + $0x8c] sm:$0xf]
        %v425 = vld [vmem:[#allocation5 + $0x90] sm:$0xff]
        %v426 = vld [vmem:[#allocation5 + $0x98] sm:$0xf]
        %v427 = vld [vmem:[#allocation5 + $0x9c] sm:$0xff]
        %v428 = vld [vmem:[#allocation5 + $0xa4] sm:$0xf]
        %v429 = vld [vmem:[#allocation5 + $0xa8] sm:$0xff]
        %v430 = vld [vmem:[#allocation5 + $0xb0] sm:$0xf]
        %v431 = vld [vmem:[#allocation5 + $0xb4] sm:$0xff]
        %v432 = vld [vmem:[#allocation5 + $0xbc] sm:$0xf]
        %v433 = vld [vmem:[%s4] sm:$0x7]
        %v435 = vlaneseq
        %v436 = vshrl.u32 %v435, 7
        %v437 = vsub.s32 0, %v436
        %v438 = vrot.slane %v433, %v437
        %v439 = vlaneseq
        %v440 = vshrl.u32 %v439, 7
        %v441 = vsub.s32 1, %v440
        %v442 = vrot.slane %v433, %v441
        %v443 = vlaneseq
        %v444 = vshrl.u32 %v443, 7
        %v445 = vsub.s32 2, %v444
        %v446 = vrot.slane %v433, %v445
        %v482 = vunpack.c.l.b16 %v401
        %v483 = vunpack.c.h.b16 %v401
        %v484 = vunpack.c.l.b16 %v402
        %v485 = vunpack.c.l.b16 %v403
        %v486 = vunpack.c.h.b16 %v403
        %v487 = vunpack.c.l.b16 %v404
        %v488 = vunpack.c.l.b16 %v405
        %v489 = vunpack.c.h.b16 %v405
        %v490 = vunpack.c.l.b16 %v406
        %v491 = vunpack.c.l.b16 %v407
        %v492 = vunpack.c.h.b16 %v407
        %v493 = vunpack.c.l.b16 %v408
        %v494 = vunpack.c.l.b16 %v409
        %v495 = vunpack.c.h.b16 %v409
        %v496 = vunpack.c.l.b16 %v410
        %v497 = vunpack.c.l.b16 %v411
        %v498 = vunpack.c.h.b16 %v411
        %v499 = vunpack.c.l.b16 %v412
        %v500 = vunpack.c.l.b16 %v413
        %v501 = vunpack.c.h.b16 %v413
        %v502 = vunpack.c.l.b16 %v414
        %v503 = vunpack.c.l.b16 %v415
        %v504 = vunpack.c.h.b16 %v415
        %v505 = vunpack.c.l.b16 %v416
        %v506 = vunpack.c.l.b16 %v417
        %v507 = vunpack.c.h.b16 %v417
        %v508 = vunpack.c.l.b16 %v418
        %v509 = vunpack.c.l.b16 %v419
        %v510 = vunpack.c.h.b16 %v419
        %v511 = vunpack.c.l.b16 %v420
        %v512 = vunpack.c.l.b16 %v421
        %v513 = vunpack.c.h.b16 %v421
        %v514 = vunpack.c.l.b16 %v422
        %v515 = vunpack.c.l.b16 %v423
        %v516 = vunpack.c.h.b16 %v423
        %v517 = vunpack.c.l.b16 %v424
        %v518 = vunpack.c.l.b16 %v425
        %v519 = vunpack.c.h.b16 %v425
        %v520 = vunpack.c.l.b16 %v426
        %v521 = vunpack.c.l.b16 %v427
        %v522 = vunpack.c.h.b16 %v427
        %v523 = vunpack.c.l.b16 %v428
        %v524 = vunpack.c.l.b16 %v429
        %v525 = vunpack.c.h.b16 %v429
        %v526 = vunpack.c.l.b16 %v430
        %v527 = vunpack.c.l.b16 %v431
        %v528 = vunpack.c.h.b16 %v431
        %v529 = vunpack.c.l.b16 %v432
        %v530 = vpack.c.b16 %v485, %v482
        %v531 = vpack.c.b16 %v486, %v483
        %v532 = vpack.c.b16 %v487, %v484
        %v533 = vpack.c.b16 %v491, %v488
        %v534 = vpack.c.b16 %v492, %v489
        %v535 = vpack.c.b16 %v493, %v490
        %v536 = vpack.c.b16 %v497, %v494
        %v537 = vpack.c.b16 %v498, %v495
        %v538 = vpack.c.b16 %v499, %v496
        %v539 = vpack.c.b16 %v503, %v500
        %v540 = vpack.c.b16 %v504, %v501
        %v541 = vpack.c.b16 %v505, %v502
        %v542 = vpack.c.b16 %v509, %v506
        %v543 = vpack.c.b16 %v510, %v507
        %v544 = vpack.c.b16 %v511, %v508
        %v545 = vpack.c.b16 %v515, %v512
        %v546 = vpack.c.b16 %v516, %v513
        %v547 = vpack.c.b16 %v517, %v514
        %v548 = vpack.c.b16 %v521, %v518
        %v549 = vpack.c.b16 %v522, %v519
        %v550 = vpack.c.b16 %v523, %v520
        %v551 = vpack.c.b16 %v527, %v524
        %v552 = vpack.c.b16 %v528, %v525
        %v553 = vpack.c.b16 %v529, %v526
        %578 = vmatprep.subr.bf16.mxu0 %v531
        %579 = vmatpush1.bf16.msra.mxu0 %v530
        %580 = vmatprep.subr.bf16.mxu0 %v534
        %581 = vmatpush1.bf16.msra.mxu0 %v533
        %582 = vmatprep.subr.bf16.mxu0 %v537
        %583 = vmatpush1.bf16.msra.mxu0 %v536
        %584 = vmatprep.subr.bf16.mxu0 %v540
        %585 = vmatpush1.bf16.msra.mxu0 %v539
        %586 = vmatprep.subr.bf16.mxu0 %v543
        %587 = vmatpush1.bf16.msra.mxu0 %v542
        %588 = vmatprep.subr.bf16.mxu0 %v546
        %589 = vmatpush1.bf16.msra.mxu0 %v545
        %590 = vmatprep.subr.bf16.mxu0 %v549
        %591 = vmatpush1.bf16.msra.mxu0 %v548
        %592 = vmatprep.subr.bf16.mxu0 %v552
        %593 = vmatpush1.bf16.msra.mxu0 %v551
        %594 = vmatprep.subr.bf16.mxu0 0
        %595 = vmatpush1.bf16.msra.mxu0 0
        %596 = vmatprep.subr.bf16.mxu0 0
        %597 = vmatpush1.bf16.msra.mxu0 0
        %598 = vmatprep.subr.bf16.mxu0 0
        %599 = vmatpush1.bf16.msra.mxu0 0
        %600 = vmatprep.subr.bf16.mxu0 0
        %601 = vmatpush1.bf16.msra.mxu0 0
        %602 = vmatprep.subr.bf16.mxu0 0
        %603 = vmatpush1.bf16.msra.mxu0 0
        %604 = vmatprep.subr.bf16.mxu0 0
        %605 = vmatpush1.bf16.msra.mxu0 0
        %606 = vmatprep.subr.bf16.mxu0 0
        %607 = vmatpush1.bf16.msra.mxu0 0
        %608 = vmatprep.subr.bf16.mxu0 0
        %609 = vmatpush1.bf16.msra.mxu0 0
        %610 = vmatprep.mubr.bf16.mxu0 0
        %611 = vmatmul.mubr.bf16.gmra.mrb[0].mxu0 %v400
        %v612 = vpop.f32.mrb[0].mxu0
        %v613 = vadd.f32 %v438, %v612
        %v614 = vpop.f32.mrb[0].mxu0
        %v615 = vadd.f32 %v442, %v614
        %v616 = vpop.f32.mrb[0].mxu0
        %v617 = vadd.f32 %v438, %v616
        %v618 = vpop.f32.mrb[0].mxu0
        %v619 = vadd.f32 %v442, %v618
        %620 = vdwg.mxu0
        %621 = vmatprep.subr.bf16.mxu0 0
        %622 = vmatpush1.bf16.msra.mxu0 %v532
        %623 = vmatprep.subr.bf16.mxu0 0
        %624 = vmatpush1.bf16.msra.mxu0 %v535
        %625 = vmatprep.subr.bf16.mxu0 0
        %626 = vmatpush1.bf16.msra.mxu0 %v538
        %627 = vmatprep.subr.bf16.mxu0 0
        %628 = vmatpush1.bf16.msra.mxu0 %v541
        %629 = vmatprep.subr.bf16.mxu0 0
        %630 = vmatpush1.bf16.msra.mxu0 %v544
        %631 = vmatprep.subr.bf16.mxu0 0
        %632 = vmatpush1.bf16.msra.mxu0 %v547
        %633 = vmatprep.subr.bf16.mxu0 0
        %634 = vmatpush1.bf16.msra.mxu0 %v550
        %635 = vmatprep.subr.bf16.mxu0 0
        %636 = vmatpush1.bf16.msra.mxu0 %v553
        %637 = vmatprep.subr.bf16.mxu0 0
        %638 = vmatpush1.bf16.msra.mxu0 0
        %639 = vmatprep.subr.bf16.mxu0 0
        %640 = vmatpush1.bf16.msra.mxu0 0
        %641 = vmatprep.subr.bf16.mxu0 0
        %642 = vmatpush1.bf16.msra.mxu0 0
        %643 = vmatprep.subr.bf16.mxu0 0
        %644 = vmatpush1.bf16.msra.mxu0 0
        %645 = vmatprep.subr.bf16.mxu0 0
        %646 = vmatpush1.bf16.msra.mxu0 0
        %647 = vmatprep.subr.bf16.mxu0 0
        %648 = vmatpush1.bf16.msra.mxu0 0
        %649 = vmatprep.subr.bf16.mxu0 0
        %650 = vmatpush1.bf16.msra.mxu0 0
        %651 = vmatprep.subr.bf16.mxu0 0
        %652 = vmatpush1.bf16.msra.mxu0 0
        %653 = vmatprep.mubr.bf16.mxu0 0
        %654 = vmatmul.mubr.bf16.gmra.mrb[0].mxu0 %v400
        %v655 = vpop.f32.mrb[0].mxu0
        %v656 = vadd.f32 %v446, %v655
        %v657 = vpop.f32.mrb[0].mxu0
        %v658 = vpop.f32.mrb[0].mxu0
        %v659 = vadd.f32 %v446, %v658
        %v660 = vpop.f32.mrb[0].mxu0
        %661 = vdwg.mxu0
        %v662 = vmul.f32 %v613, 0.17677669
        %v663 = vmul.f32 %v617, 0.17677669
        %v664 = vpack.c.bf16 %v663, %v662
        %v666 = vunpack.c.l.b16 %v664
        %v667 = vunpack.c.h.b16 %v664
        %v668 = vpack.c.b16 %v666, %v666
        %v669 = vpack.c.b16 %v667, %v667
        %vm672 = vcmask 257024
        %673 = vst.msk [vmem:[%s337] sm:$0xf] %vm672, %v668
        %674 = vst.msk [vmem:[%s337 + $0x4] sm:$0xf] %vm672, %v669
        %v675 = vpack.c.bf16 %v619, %v615
        %v677 = vunpack.c.l.b16 %v675
        %v678 = vunpack.c.h.b16 %v675
        %v679 = vpack.c.b16 %v677, %v677
        %v680 = vpack.c.b16 %v678, %v678
        %683 = vst.msk [vmem:[%s344] sm:$0xf] %vm672, %v679
        %684 = vst.msk [vmem:[%s344 + $0x4] sm:$0xf] %vm672, %v680
        %v685 = vpack.c.bf16 %v659, %v656
        %v687 = vunpack.c.l.b16 %v685
        %v688 = vunpack.c.h.b16 %v685
        %v689 = vpack.c.b16 %v687, %v687
        %v690 = vpack.c.b16 %v688, %v688
        %693 = vst.msk [vmem:[%s351] sm:$0xf] %vm672, %v689
        %694 = vst.msk [vmem:[%s351 + $0x4] sm:$0xf] %vm672, %v690
        %695 = vrot.lane.b32.xlu0 %v668, 96
        %v696 = vpop.permute.xlu0 %695
        %697 = vrot.lane.b32.xlu0 %v669, 96
        %v698 = vpop.permute.xlu0 %697
        %s701 = scalar_lea.vmem %s337, 8 [#allocation7]
        %702 = vst.msk [vmem:[%s701] sm:$0xf] %vm672, %v696
        %703 = vst.msk [vmem:[%s701 + $0x4] sm:$0xf] %vm672, %v698
        %704 = vrot.lane.b32.xlu0 %v679, 96
        %v705 = vpop.permute.xlu0 %704
        %706 = vrot.lane.b32.xlu0 %v680, 96
        %v707 = vpop.permute.xlu0 %706
        %s710 = scalar_lea.vmem %s344, 8 [#allocation8]
        %711 = vst.msk [vmem:[%s710] sm:$0xf] %vm672, %v705
        %712 = vst.msk [vmem:[%s710 + $0x4] sm:$0xf] %vm672, %v707
        %713 = vrot.lane.b32.xlu0 %v689, 96
        %v714 = vpop.permute.xlu0 %713
        %715 = vrot.lane.b32.xlu0 %v690, 96
        %v716 = vpop.permute.xlu0 %715
        %s719 = scalar_lea.vmem %s351, 8 [#allocation10]
        %720 = vst.msk [vmem:[%s719] sm:$0xf] %vm672, %v714
        %721 = vst.msk [vmem:[%s719 + $0x4] sm:$0xf] %vm672, %v716
        %722 = vrot.lane.b32.xlu0 %v668, 64
        %v723 = vpop.permute.xlu0 %722
        %724 = vrot.lane.b32.xlu0 %v669, 64
        %v725 = vpop.permute.xlu0 %724
        %s728 = scalar_lea.vmem %s337, 16 [#allocation7]
        %729 = vst.msk [vmem:[%s728] sm:$0xf] %vm672, %v723
        %730 = vst.msk [vmem:[%s728 + $0x4] sm:$0xf] %vm672, %v725
        %731 = vrot.lane.b32.xlu0 %v679, 64
        %v732 = vpop.permute.xlu0 %731
        %733 = vrot.lane.b32.xlu0 %v680, 64
        %v734 = vpop.permute.xlu0 %733
        %s737 = scalar_lea.vmem %s344, 16 [#allocation8]
        %738 = vst.msk [vmem:[%s737] sm:$0xf] %vm672, %v732
        %739 = vst.msk [vmem:[%s737 + $0x4] sm:$0xf] %vm672, %v734
        %740 = vrot.lane.b32.xlu0 %v689, 64
        %v741 = vpop.permute.xlu0 %740
        %742 = vrot.lane.b32.xlu0 %v690, 64
        %v743 = vpop.permute.xlu0 %742
        %s746 = scalar_lea.vmem %s351, 16 [#allocation10]
        %747 = vst.msk [vmem:[%s746] sm:$0xf] %vm672, %v741
        %748 = vst.msk [vmem:[%s746 + $0x4] sm:$0xf] %vm672, %v743
        %749 = vrot.lane.b32.xlu0 %v668, 32
        %v750 = vpop.permute.xlu0 %749
        %751 = vrot.lane.b32.xlu0 %v669, 32
        %v752 = vpop.permute.xlu0 %751
        %s755 = scalar_lea.vmem %s337, 24 [#allocation7]
        %756 = vst.msk [vmem:[%s755] sm:$0xf] %vm672, %v750
        %757 = vst.msk [vmem:[%s755 + $0x4] sm:$0xf] %vm672, %v752
        %758 = vrot.lane.b32.xlu0 %v679, 32
        %v759 = vpop.permute.xlu0 %758
        %760 = vrot.lane.b32.xlu0 %v680, 32
        %v761 = vpop.permute.xlu0 %760
        %s764 = scalar_lea.vmem %s344, 24 [#allocation8]
        %765 = vst.msk [vmem:[%s764] sm:$0xf] %vm672, %v759
        %766 = vst.msk [vmem:[%s764 + $0x4] sm:$0xf] %vm672, %v761
        %767 = vrot.lane.b32.xlu0 %v689, 32
        %v768 = vpop.permute.xlu0 %767
        %769 = vrot.lane.b32.xlu0 %v690, 32
        %v770 = vpop.permute.xlu0 %769
        %s773 = scalar_lea.vmem %s351, 24 [#allocation10]
        %774 = vst.msk [vmem:[%s773] sm:$0xf] %vm672, %v768
        %775 = vst.msk [vmem:[%s773 + $0x4] sm:$0xf] %vm672, %v770
        %s776 = sand.u32 %s163, 1
        %s777 = scalar_lea.sflag [#allocation4], %s776
        %s778 = sand.u32 %s163, 1
        %s779 = smul.addr %s778, 32
        %s780 = scalar_lea.vmem [#allocation7], %s779
        %s781 = sand.u32 %s29, 1
        %s782 = scalar_lea.sflag [#allocation9], %s781
        %s783 = sand.u32 %s191, 1
        %s784 = smul.addr %s783, 32
        %s785 = scalar_lea.vmem [#allocation8], %s784
        %s786 = sand.u32 %s29, 1
        %s787 = scalar_lea.sflag [#allocation9], %s786
        %s788 = sand.u32 %s219, 1
        %s789 = smul.addr %s788, 32
        %s790 = scalar_lea.vmem [#allocation10], %s789
        // Predicated region
        $region49: #{tpu_custom_call.1} parent=39 // pred_check
          %p791 = pneg %p173
        $region50: #{tpu_custom_call.1} parent=39 // pred_check_branch
          %793 = sbr.rel (%p791) target = $region52
        $region51: #{tpu_custom_call.1} parent=39 // pred_region
          #allocation12 [shape = 'u32[6]{0}', space=smem, size = 0x18, scoped, tag = 'DMA stride descriptor']
          %s794 = smul.u32 2, %s34
          %s796 = ssub.s32 512, 512
          %797 = vsyncadd %s777, %s796
          %s798 = smul.addr %s33, 16
          %s799 = sadd.s32 %s794, %s798
          %s800 = smul.addr %s799, 64
          %s801 = scalar_lea.hbm %s5, %s800
          %s803 = sshll.u32 1, 14
          %s804 = sxor.u32 4294967295, %s803
          %s807 = sshll.u32 7, 18
          %s808 = sxor.u32 4294967295, %s807
          %s809 = sand.u32 0, %s808
          %s811 = sor.u32 %s809, 0
          %s813 = sshll.u32 3, 24
          %s814 = sxor.u32 4294967295, %s813
          %s815 = sand.u32 %s811, %s814
          %s817 = sor.u32 %s815, 0
          %s818 = sshll.u32 %s780, 4
          %s819 = int_to_ptr.vmem [resolvable:$true] %s818
          %825 = sst [smem:[#allocation12]] 128
          %s826 = scalar_lea.smem [#allocation12], 1
          %827 = sst [smem:[%s826]] 256
          %s828 = scalar_lea.smem [#allocation12], 2
          %829 = sst [smem:[%s828]] 2
          %s830 = scalar_lea.smem [#allocation12], 3
          %831 = sst [smem:[%s830]] 64
          %s832 = scalar_lea.smem [#allocation12], 4
          %833 = sst [smem:[%s832]] 64
          %s834 = scalar_lea.smem [#allocation12], 5
          %835 = sst [smem:[%s834]] 4
          %837 = dma.general %s819, 512, %s801, %s777, [#allocation11], [#allocation12], %s817, 0
        $region52: #{tpu_custom_call.1} parent=39 // pred_fallthru
          _
        // Predicated region
        $region53: #{tpu_custom_call.1} parent=39 // pred_check
          %p838 = pneg %p201
        $region54: #{tpu_custom_call.1} parent=39 // pred_check_branch
          %840 = sbr.rel (%p838) target = $region56
        $region55: #{tpu_custom_call.1} parent=39 // pred_region
          #allocation14 [shape = 'u32[6]{0}', space=smem, size = 0x18, scoped, tag = 'DMA stride descriptor']
          %s841 = smul.u32 2, %s34
          %s843 = ssub.s32 512, 512
          %844 = vsyncadd %s782, %s843
          %s845 = smul.addr %s33, 16
          %s846 = sadd.s32 %s841, %s845
          %s847 = smul.addr %s846, 64
          %s848 = scalar_lea.hbm %s6, %s847
          %s850 = sshll.u32 1, 14
          %s851 = sxor.u32 4294967295, %s850
          %s854 = sshll.u32 7, 18
          %s855 = sxor.u32 4294967295, %s854
          %s856 = sand.u32 0, %s855
          %s858 = sor.u32 %s856, 0
          %s860 = sshll.u32 3, 24
          %s861 = sxor.u32 4294967295, %s860
          %s862 = sand.u32 %s858, %s861
          %s864 = sor.u32 %s862, 0
          %s865 = sshll.u32 %s785, 4
          %s866 = int_to_ptr.vmem [resolvable:$true] %s865
          %872 = sst [smem:[#allocation14]] 128
          %s873 = scalar_lea.smem [#allocation14], 1
          %874 = sst [smem:[%s873]] 256
          %s875 = scalar_lea.smem [#allocation14], 2
          %876 = sst [smem:[%s875]] 2
          %s877 = scalar_lea.smem [#allocation14], 3
          %878 = sst [smem:[%s877]] 64
          %s879 = scalar_lea.smem [#allocation14], 4
          %880 = sst [smem:[%s879]] 64
          %s881 = scalar_lea.smem [#allocation14], 5
          %882 = sst [smem:[%s881]] 4
          %884 = dma.general %s866, 512, %s848, %s782, [#allocation13], [#allocation14], %s864, 0
        $region56: #{tpu_custom_call.1} parent=39 // pred_fallthru
          _
        // Predicated region
        $region57: #{tpu_custom_call.1} parent=39 // pred_check
          %p885 = pneg %p229
        $region58: #{tpu_custom_call.1} parent=39 // pred_check_branch
          %887 = sbr.rel (%p885) target = $region60
        $region59: #{tpu_custom_call.1} parent=39 // pred_region
          #allocation16 [shape = 'u32[6]{0}', space=smem, size = 0x18, scoped, tag = 'DMA stride descriptor']
          %s888 = smul.u32 2, %s34
          %s890 = ssub.s32 512, 512
          %891 = vsyncadd %s787, %s890
          %s892 = smul.addr %s33, 16
          %s893 = sadd.s32 %s888, %s892
          %s894 = smul.addr %s893, 64
          %s895 = scalar_lea.hbm %s7, %s894
          %s897 = sshll.u32 1, 14
          %s898 = sxor.u32 4294967295, %s897
          %s901 = sshll.u32 7, 18
          %s902 = sxor.u32 4294967295, %s901
          %s903 = sand.u32 0, %s902
          %s905 = sor.u32 %s903, 0
          %s907 = sshll.u32 3, 24
          %s908 = sxor.u32 4294967295, %s907
          %s909 = sand.u32 %s905, %s908
          %s911 = sor.u32 %s909, 0
          %s912 = sshll.u32 %s790, 4
          %s913 = int_to_ptr.vmem [resolvable:$true] %s912
          %919 = sst [smem:[#allocation16]] 128
          %s920 = scalar_lea.smem [#allocation16], 1
          %921 = sst [smem:[%s920]] 256
          %s922 = scalar_lea.smem [#allocation16], 2
          %923 = sst [smem:[%s922]] 2
          %s924 = scalar_lea.smem [#allocation16], 3
          %925 = sst [smem:[%s924]] 64
          %s926 = scalar_lea.smem [#allocation16], 4
          %927 = sst [smem:[%s926]] 64
          %s928 = scalar_lea.smem [#allocation16], 5
          %929 = sst [smem:[%s928]] 4
          %931 = dma.general %s913, 512, %s895, %s787, [#allocation15], [#allocation16], %s911, 0
        $region60: #{tpu_custom_call.1} parent=39 // pred_fallthru
          _
      $region40: #{tpu_custom_call.1} parent=5 // pred_fallthru
        _
      %p932 = scmp.le.s32.totalorder 2, %s24
      // Predicated region
      $region61: #{tpu_custom_call.1} parent=5 // pred_check
        %p933 = pneg %p932
      $region62: #{tpu_custom_call.1} parent=5 // pred_check_branch
        %935 = sbr.rel (%p933) target = $region64
      $region63: #{tpu_custom_call.1} parent=5 // pred_region
        %s936 = ssub.s32 %s24, 2
        // Predicated region
        $region65: #{tpu_custom_call.1} parent=63 // pred_check
          %p937 = pneg %p179
        $region66: #{tpu_custom_call.1} parent=63 // pred_check_branch
          %939 = sbr.rel (%p937) target = $region68
        $region67: #{tpu_custom_call.1} parent=63 // pred_region
          %s940 = sand.u32 %s164, 1
          %s941 = scalar_lea.sflag [#allocation4], %s940
          %s942 = sand.u32 %s164, 1
          %s943 = smul.addr %s942, 32
          %s944 = scalar_lea.vmem [#allocation7], %s943
          %945 = dma.done %s941, 512
        $region68: #{tpu_custom_call.1} parent=63 // pred_fallthru
          _
        // Predicated region
        $region69: #{tpu_custom_call.1} parent=63 // pred_check
          %p946 = pneg %p207
        $region70: #{tpu_custom_call.1} parent=63 // pred_check_branch
          %948 = sbr.rel (%p946) target = $region72
        $region71: #{tpu_custom_call.1} parent=63 // pred_region
          %s949 = sand.u32 %s30, 1
          %s950 = scalar_lea.sflag [#allocation9], %s949
          %s951 = sand.u32 %s192, 1
          %s952 = smul.addr %s951, 32
          %s953 = scalar_lea.vmem [#allocation8], %s952
          %954 = dma.done %s950, 512
        $region72: #{tpu_custom_call.1} parent=63 // pred_fallthru
          _
        // Predicated region
        $region73: #{tpu_custom_call.1} parent=63 // pred_check
          %p955 = pneg %p235
        $region74: #{tpu_custom_call.1} parent=63 // pred_check_branch
          %957 = sbr.rel (%p955) target = $region76
        $region75: #{tpu_custom_call.1} parent=63 // pred_region
          %s958 = sand.u32 %s30, 1
          %s959 = scalar_lea.sflag [#allocation9], %s958
          %s960 = sand.u32 %s220, 1
          %s961 = smul.addr %s960, 32
          %s962 = scalar_lea.vmem [#allocation10], %s961
          %963 = dma.done %s959, 512
        $region76: #{tpu_custom_call.1} parent=63 // pred_fallthru
          _
      $region64: #{tpu_custom_call.1} parent=5 // pred_fallthru
        _
    $region6: #{tpu_custom_call.1} parent=1 // loop_footer
      %s28 = sadd.s32 1, %s24
    $region7: #{tpu_custom_call.1} parent=1 // loop_footer_branch
      %23 = sbr.rel target = $region3
    $region8: #{tpu_custom_call.1} parent=1 // loop_exit
      _
    %964 = vsyncpa [#allocation3], 1
    %s965 = scalar_lea.sflag [#allocation3], 1
    %966 = vsyncpa %s965, 1
    %967 = vsyncpa [#allocation6], 1
    %968 = vsyncpa [#allocation4], 1
    %s969 = scalar_lea.sflag [#allocation4], 1
    %970 = vsyncpa %s969, 1
    %971 = vsyncpa [#allocation9], 1
    %s972 = scalar_lea.sflag [#allocation9], 1
    %973 = vsyncpa %s972, 1

</llo_original>
